<compile_context>
chip_gen: v5e
topology: v5e:2x2
jax: 0.10.0
libtpu: 0.0.40
codegen_flags: <defaults>
</compile_context>

<pallas_src>
import jax
import jax.numpy as jnp
import numpy as np
from jax.experimental import pallas as pl
from jax.experimental.pallas import tpu as pltpu


def _round_up(n, m):
    return ((n + m - 1) // m) * m


def reward_net_kernel(x_ref, w1_ref, b1_ref, w2_ref, b2_ref, o_ref):
    """One batch tile of the lane-packed reward-net forward.

    x_ref : (TBp, PACK*Din)   PACK batch rows packed along the lane axis
    w1_ref: (PACK*Din, PACK*H) block-diagonal layer-1 weight (VMEM resident)
    b1_ref: (1, PACK*H)        layer-1 bias tiled PACK times (VMEM resident)
    w2_ref: (PACK*H, PACK)     per-segment layer-2 weight (VMEM resident)
    b2_ref: (1,)               layer-2 bias scalar in SMEM
    o_ref : (TBp, PACK)        output tile; row-major flatten == batch order
    """
    x = x_ref[...]
    # layer 1: Linear(Din -> H) per packed segment on the MXU, f32 accumulation
    h = jnp.dot(x, w1_ref[...], preferred_element_type=jnp.float32)
    h = h + b1_ref[...]
    # LeakyReLU (PyTorch default negative_slope = 0.01)
    h = jnp.where(h > 0, h, 0.01 * h)
    # layer 2: Linear(H -> 1) per packed segment as an MXU contraction
    # (avoids the cross-lane XLU reduce + (1, TB) relayout of the old kernel)
    y = jnp.dot(h, w2_ref[...], preferred_element_type=jnp.float32)
    y = y + b2_ref[0]
    o_ref[...] = jnp.clip(y, -10.0, 10.0).astype(o_ref.dtype)


def reward_net_forward(x, w1, b1, w2_row, b2, *, tb=8192):
    """x: (B, Din); w1: (Din, H); b1: (1, H); w2_row: (1, H); b2: (1,).

    Returns (B,) float32, matching the torch forward (output_size == 1,
    squeeze(-1)).  `tb` is the number of batch rows processed per grid step.
    """
    B, Din = x.shape
    Din_w, H = w1.shape
    assert Din_w == Din
    f32 = jnp.float32

    # --- lane packing: put PACK batch rows side by side on the 128-lane axis.
    # PACK is the largest value <= 128 // max(Din, H) that divides B exactly,
    # so no jnp.pad (and therefore no extra full HBM pass over x) is needed.
    pack_cap = max(1, 128 // max(Din, H))
    pack = next(p for p in range(pack_cap, 0, -1) if B % p == 0)
    rows = B // pack
    pd, ph = pack * Din, pack * H

    xp = x.reshape(rows, pd)  # pure row-major reshape of the batch axis

    # One-time (tiny) packed parameter prep.
    eye_p = jnp.eye(pack, dtype=f32)
    w1_blk = (eye_p[:, None, :, None]
              * w1.astype(f32)[None, :, None, :]).reshape(pd, ph)
    w1_blk = w1_blk.astype(x.dtype)  # bf16 x => bf16 weights; accumulation stays f32
    b1_t = jnp.tile(b1.reshape(1, H).astype(f32), (1, pack))
    w2_mat = (eye_p[:, None, :]
              * w2_row.reshape(H).astype(f32)[None, :, None]).reshape(ph, pack)
    b2 = b2.reshape(1).astype(f32)

    # --- batch tiling: packed rows per grid step (multiple of 8 sublanes).
    tbp = max(8, (max(tb, 8 * pack) // pack) // 8 * 8)
    if 16 <= rows <= tbp:
        # keep >= 2 grid steps so both TensorCores get work on v7x
        tbp = max(8, _round_up(pl.cdiv(rows, 2), 8))
    tbp = min(tbp, rows)
    grid = pl.cdiv(rows, tbp)  # ragged last block handled by Pallas; no pad

    out = pl.pallas_call(
        reward_net_kernel,
        out_shape=jax.ShapeDtypeStruct((grid * tbp, pack), jnp.float32),
        grid=(grid,),
        in_specs=[
            pl.BlockSpec((tbp, pd), lambda i: (i, 0)),            # x: streamed
            pl.BlockSpec((pd, ph), lambda i: (0, 0)),             # w1 block-diag: resident
            pl.BlockSpec((1, ph), lambda i: (0, 0)),              # b1 tiled: resident
            pl.BlockSpec((ph, pack), lambda i: (0, 0)),           # w2 segments: resident
            pl.BlockSpec(memory_space=pltpu.MemorySpace.SMEM),    # b2 scalar
        ],
        out_specs=pl.BlockSpec((tbp, pack), lambda i: (i, 0)),
        compiler_params=pltpu.CompilerParams(
            dimension_semantics=("parallel",),
            vmem_limit_bytes=48 * 1024 * 1024,
        ),
    )(xp, w1_blk, b1_t, w2_mat, b2)

    # torch's x.squeeze(-1): row-major flatten restores batch order; drop the
    # (never-consumed) rows produced by the ragged last block.
    return out.reshape(-1)[:B]


def make_params(key, input_size, hidden_size, output_size=1):
    """Deterministic synthetic params (PyTorch Linear-style uniform init).
    w1 stored pre-transposed as (in, out); layer-2 weight stored as a (1, H) row."""
    assert output_size == 1  # reward head; forward squeezes the last dim
    k1, k2, k3, k4 = jax.random.split(key, 4)
    lim1 = 1.0 / float(input_size) ** 0.5
    lim2 = 1.0 / float(hidden_size) ** 0.5
    w1 = jax.random.uniform(k1, (input_size, hidden_size), jnp.float32, -lim1, lim1)
    b1 = jax.random.uniform(k2, (1, hidden_size), jnp.float32, -lim1, lim1)
    w2 = jax.random.uniform(k3, (1, hidden_size), jnp.float32, -lim2, lim2)
    b2 = jax.random.uniform(k4, (output_size,), jnp.float32, -lim2, lim2)
    return w1, b1, w2, b2


def _reference(x, w1, b1, w2_row, b2):
    """float64 numpy reference of the torch forward."""
    x = np.asarray(x, np.float64)
    w1 = np.asarray(w1, np.float64)
    b1 = np.asarray(b1, np.float64)
    w2 = np.asarray(w2_row, np.float64)
    b2 = np.asarray(b2, np.float64)
    h = x @ w1 + b1
    h = np.where(h > 0, h, 0.01 * h)
    y = h @ w2.T + b2
    return np.clip(y, -10.0, 10.0)[:, 0]


if __name__ == "__main__":
    # Shapes consistent with the module: input_size (Z_SIZE) = 32,
    # hidden_size = 32, output_size = 1, small batch = 8.
    B, Din, H, Dout = 8, 32, 32, 1

    key = jax.random.PRNGKey(0)
    kx, kp, kx2 = jax.random.split(key, 3)
    x = jax.random.normal(kx, (B, Din), jnp.float32)
    w1, b1, w2_row, b2 = make_params(kp, Din, H, Dout)

    y = reward_net_forward(x, w1, b1, w2_row, b2)
    jax.block_until_ready(y)
    y_ref = _reference(x, w1, b1, w2_row, b2)
    assert y.shape == (B,)
    assert np.allclose(np.asarray(y), y_ref, atol=2e-2, rtol=2e-2)

    # Second check exercising the multi-step batch grid (G > 1), VMEM-resident
    # weights, the ragged last input block (300 packed rows = 75, tile = 64),
    # and the packed (TBp, PACK) output tiles.
    B2 = 300
    x2 = jax.random.normal(kx2, (B2, Din), jnp.float32)
    y2 = reward_net_forward(x2, w1, b1, w2_row, b2, tb=256)
    jax.block_until_ready(y2)
    y2_ref = _reference(x2, w1, b1, w2_row, b2)
    assert y2.shape == (B2,)
    assert np.allclose(np.asarray(y2), y2_ref, atol=2e-2, rtol=2e-2)

    print("KERNEL_OK")
</pallas_src>

<mosaic_0001>
module attributes {stable_mosaic.version = 11 : i64} {
  func.func @reward_net_kernel(%arg0: i32, %arg1: memref<2x128xf32, #tpu.memory_space<vmem>>, %arg2: memref<128x128xf32, #tpu.memory_space<vmem>>, %arg3: memref<1x128xf32, #tpu.memory_space<vmem>>, %arg4: memref<128x4xf32, #tpu.memory_space<vmem>>, %arg5: memref<1xf32, #tpu.memory_space<smem>>, %arg6: memref<2x4xf32, #tpu.memory_space<vmem>>) attributes {dimension_semantics = [#tpu.dimension_semantics<parallel>], iteration_bounds = array<i64: 1>, scalar_prefetch = 0 : i64, scratch_operands = 0 : i64, tpu.core_type = #tpu.core_type<tc>, window_params = [{transform_indices = @transform_0, window_bounds = array<i64: 2, 128>}, {pipeline_mode = #tpu.pipeline_mode<synchronous>, transform_indices = @transform_1, window_bounds = array<i64: 128, 128>}, {pipeline_mode = #tpu.pipeline_mode<synchronous>, transform_indices = @transform_2, window_bounds = array<i64: 1, 128>}, {pipeline_mode = #tpu.pipeline_mode<synchronous>, transform_indices = @transform_3, window_bounds = array<i64: 128, 4>}, {transform_indices = @transform_4, window_bounds = array<i64: 1>}, {transform_indices = @transform_5, window_bounds = array<i64: 2, 4>}]} {
    %c0 = arith.constant 0 : index
    %c0_0 = arith.constant 0 : index
    %0 = vector.load %arg1[%c0, %c0_0] : memref<2x128xf32, #tpu.memory_space<vmem>>, vector<2x128xf32>
    %c0_1 = arith.constant 0 : index
    %c0_2 = arith.constant 0 : index
    %1 = vector.load %arg2[%c0_1, %c0_2] : memref<128x128xf32, #tpu.memory_space<vmem>>, vector<128x128xf32>
    %cst = arith.constant dense<0.000000e+00> : vector<2x128xf32>
    %2 = tpu.matmul %0, %1, %cst {dimension_numbers = #tpu.dot_dimension_numbers<[1], [0], [0], [1], [0, 0, 1, 1], [], []>} : vector<2x128xf32>, vector<128x128xf32>, vector<2x128xf32> -> vector<2x128xf32>
    %c0_3 = arith.constant 0 : index
    %c0_4 = arith.constant 0 : index
    %3 = vector.load %arg3[%c0_3, %c0_4] : memref<1x128xf32, #tpu.memory_space<vmem>>, vector<1x128xf32>
    %4 = vector.broadcast %3 : vector<1x128xf32> to vector<2x128xf32>
    %5 = arith.addf %2, %4 : vector<2x128xf32>
    %cst_5 = arith.constant 0.000000e+00 : f32
    %6 = vector.broadcast %cst_5 : f32 to vector<2x128xf32>
    %7 = arith.cmpf ogt, %5, %6 : vector<2x128xf32>
    %cst_6 = arith.constant 0.00999999977 : f32
    %8 = vector.broadcast %cst_6 : f32 to vector<2x128xf32>
    %9 = arith.mulf %8, %5 : vector<2x128xf32>
    %10 = arith.select %7, %5, %9 : vector<2x128xi1>, vector<2x128xf32>
    %c0_7 = arith.constant 0 : index
    %c0_8 = arith.constant 0 : index
    %11 = vector.load %arg4[%c0_7, %c0_8] : memref<128x4xf32, #tpu.memory_space<vmem>>, vector<128x4xf32>
    %cst_9 = arith.constant dense<0.000000e+00> : vector<2x4xf32>
    %12 = tpu.matmul %10, %11, %cst_9 {dimension_numbers = #tpu.dot_dimension_numbers<[1], [0], [0], [1], [0, 0, 1, 1], [], []>} : vector<2x128xf32>, vector<128x4xf32>, vector<2x4xf32> -> vector<2x4xf32>
    %c0_10 = arith.constant 0 : index
    %13 = memref.load %arg5[%c0_10] : memref<1xf32, #tpu.memory_space<smem>>
    %14 = vector.broadcast %13 : f32 to vector<2x4xf32>
    %15 = arith.addf %12, %14 : vector<2x4xf32>
    %cst_11 = arith.constant -1.000000e+01 : f32
    %cst_12 = arith.constant 1.000000e+01 : f32
    %16 = vector.broadcast %cst_11 : f32 to vector<2x4xf32>
    %17 = arith.maximumf %16, %15 : vector<2x4xf32>
    %18 = vector.broadcast %cst_12 : f32 to vector<2x4xf32>
    %19 = arith.minimumf %18, %17 : vector<2x4xf32>
    %c0_13 = arith.constant 0 : index
    %c0_14 = arith.constant 0 : index
    %20 = vector.load %arg6[%c0_13, %c0_14] : memref<2x4xf32, #tpu.memory_space<vmem>>, vector<2x4xf32>
    tpu.vector_store %arg6[%c0_13, %c0_14], %19 {strides = array<i32>} : memref<2x4xf32, #tpu.memory_space<vmem>>, vector<2x4xf32>,
    return
  }
  func.func @transform_0(%arg0: i32) -> (i32, i32) {
    %c0_i32 = arith.constant 0 : i32
    %c0_i32_0 = arith.constant 0 : i32
    return %arg0, %c0_i32 : i32, i32
  }
  func.func @transform_1(%arg0: i32) -> (i32, i32) {
    %c0_i32 = arith.constant 0 : i32
    %c0_i32_0 = arith.constant 0 : i32
    %c0_i32_1 = arith.constant 0 : i32
    return %c0_i32, %c0_i32_0 : i32, i32
  }
  func.func @transform_2(%arg0: i32) -> (i32, i32) {
    %c0_i32 = arith.constant 0 : i32
    %c0_i32_0 = arith.constant 0 : i32
    %c0_i32_1 = arith.constant 0 : i32
    return %c0_i32, %c0_i32_0 : i32, i32
  }
  func.func @transform_3(%arg0: i32) -> (i32, i32) {
    %c0_i32 = arith.constant 0 : i32
    %c0_i32_0 = arith.constant 0 : i32
    %c0_i32_1 = arith.constant 0 : i32
    return %c0_i32, %c0_i32_0 : i32, i32
  }
  func.func @transform_4(%arg0: i32) -> i32 {
    %c0_i32 = arith.constant 0 : i32
    %c0_i32_0 = arith.constant 0 : i32
    return %c0_i32 : i32
  }
  func.func @transform_5(%arg0: i32) -> (i32, i32) {
    %c0_i32 = arith.constant 0 : i32
    %c0_i32_0 = arith.constant 0 : i32
    return %arg0, %c0_i32 : i32, i32
  }
}

</mosaic_0001>

<llo_original>
// kernel: tpu_custom_call.1
$region0: #{tpu_custom_call.1}
  #allocation0 [shape = 'u32[]', space=smem, size = 0x4, offset = 0x4, fixed_abs, tag = 'smem constant byte address 0x4 - core index']
  #allocation1 [shape = 'u32[72,128]{1,0:T(1,128)}', space=vmem, size = 0x9000, scoped, tag = 'internal scratch']
  #allocation2 [shape = 'f32[1]{0:T(128)S(6)}', space=smem, size = 0x200, scoped, tag = 'scoped memory for tpu_custom_call.1']
  %s0 = inlined_call_operand.vmem [shape: f32[2,128], index: 0, kind: input, shape index: {}]
  %s1 = inlined_call_operand.vmem [shape: f32[128,128], index: 1, kind: input, shape index: {}]
  %s2 = inlined_call_operand.vmem [shape: f32[1,128], index: 2, kind: input, shape index: {}]
  %s3 = inlined_call_operand.vmem [shape: f32[128,4], index: 3, kind: input, shape index: {}]
  %s4 = inlined_call_operand.<no memory space> [shape: f32[1], index: 4, kind: input, shape index: {}]
  %s5 = inlined_call_operand.hbm [shape: f32[2,4], index: 5, kind: output, shape index: {}]
  %s6 = sld [smem:[#allocation0]]
  $region30: #{tpu_custom_call.1} parent=0
    _
  %s8 = ssub.s32 1, %s6
  %s9 = scalar_select 0, %s8, %s6
  %10 = sst [smem:[#allocation2]] %s4
  $region1: #{tpu_custom_call.1} parent=0
    #allocation3 [shape = 'u8[1024]{0}', space=vmem, size = 0x400, scoped, tag = 'output window, operand 0, single buffered']
    #allocation4 [shape = 's32[1]{0}', space=sflag, size = 0x4, scoped, tag = 'scoped memory for tpu_custom_call.1']
    %11 = vsyncpa [#allocation4], 0
    // Predicated region
    $region2: #{tpu_custom_call.1} parent=1 // pred_check
      _
    $region3: #{tpu_custom_call.1} parent=1 // pred_check_branch
      %13 = sbr.rel (0) target = $region5
    $region4: #{tpu_custom_call.1} parent=1 // pred_region
      _
    $region5: #{tpu_custom_call.1} parent=1 // pred_fallthru
      _
    // Predicated region
    $region6: #{tpu_custom_call.1} parent=1 // pred_check
      _
    $region7: #{tpu_custom_call.1} parent=1 // pred_check_branch
      %15 = sbr.rel (0) target = $region9
    $region8: #{tpu_custom_call.1} parent=1 // pred_region
      _
    $region9: #{tpu_custom_call.1} parent=1 // pred_fallthru
      _
    // Predicated region
    $region10: #{tpu_custom_call.1} parent=1 // pred_check
      _
    $region11: #{tpu_custom_call.1} parent=1 // pred_check_branch
      %17 = sbr.rel (0) target = $region13
    $region12: #{tpu_custom_call.1} parent=1 // pred_region
      _
    $region13: #{tpu_custom_call.1} parent=1 // pred_fallthru
      _
    // Predicated region
    $region14: #{tpu_custom_call.1} parent=1 // pred_check
      _
    $region15: #{tpu_custom_call.1} parent=1 // pred_check_branch
      %19 = sbr.rel (0) target = $region17
    $region16: #{tpu_custom_call.1} parent=1 // pred_region
      _
    $region17: #{tpu_custom_call.1} parent=1 // pred_fallthru
      _
    // Predicated region
    $region18: #{tpu_custom_call.1} parent=1 // pred_check
      _
    $region19: #{tpu_custom_call.1} parent=1 // pred_check_branch
      %21 = sbr.rel (0) target = $region21
    $region20: #{tpu_custom_call.1} parent=1 // pred_region
      _
    $region21: #{tpu_custom_call.1} parent=1 // pred_fallthru
      _
    %v22 = vld [vmem:[%s0] sm:$0x3]
    %v23 = vld [vmem:[%s1] sm:$0xff]
    %v24 = vld [vmem:[%s1 + $0x8] sm:$0xff]
    %v25 = vld [vmem:[%s1 + $0x10] sm:$0xff]
    %v26 = vld [vmem:[%s1 + $0x18] sm:$0xff]
    %v27 = vld [vmem:[%s1 + $0x20] sm:$0xff]
    %v28 = vld [vmem:[%s1 + $0x28] sm:$0xff]
    %v29 = vld [vmem:[%s1 + $0x30] sm:$0xff]
    %v30 = vld [vmem:[%s1 + $0x38] sm:$0xff]
    %v31 = vld [vmem:[%s1 + $0x40] sm:$0xff]
    %v32 = vld [vmem:[%s1 + $0x48] sm:$0xff]
    %v33 = vld [vmem:[%s1 + $0x50] sm:$0xff]
    %v34 = vld [vmem:[%s1 + $0x58] sm:$0xff]
    %v35 = vld [vmem:[%s1 + $0x60] sm:$0xff]
    %v36 = vld [vmem:[%s1 + $0x68] sm:$0xff]
    %v37 = vld [vmem:[%s1 + $0x70] sm:$0xff]
    %v38 = vld [vmem:[%s1 + $0x78] sm:$0xff]
    %v39 = vld [vmem:[%s2] sm:$0x1]
    %v41 = vperm.slane %v39, 0
    %43 = vmatpush.msra.mxu0 %v38
    %44 = vmatpush.msra.mxu0 %v37
    %45 = vmatpush.msra.mxu0 %v36
    %46 = vmatpush.msra.mxu0 %v35
    %47 = vmatpush.msra.mxu0 %v34
    %48 = vmatpush.msra.mxu0 %v33
    %49 = vmatpush.msra.mxu0 %v32
    %50 = vmatpush.msra.mxu0 %v31
    %51 = vmatpush.msra.mxu0 %v30
    %52 = vmatpush.msra.mxu0 %v29
    %53 = vmatpush.msra.mxu0 %v28
    %54 = vmatpush.msra.mxu0 %v27
    %55 = vmatpush.msra.mxu0 %v26
    %56 = vmatpush.msra.mxu0 %v25
    %57 = vmatpush.msra.mxu0 %v24
    %58 = vmatpush.msra.mxu0 %v23
    %59 = vmatmul.f32.gmra.mxu0 %v22
    %v60 = vpop.f32.mrf.mxu0
    %v61 = vadd.f32 %v41, %v60
    %62 = vdwg.mxu0
    %vm63 = vcmp.gt.f32.partialorder %v61, 0.0
    %v64 = vmul.f32 %v61, 0.01
    %v65 = vsel %vm63, %v61, %v64
    %v66 = vld [vmem:[%s3] sm:$0xff]
    %v67 = vld [vmem:[%s3 + $0x8] sm:$0xff]
    %v68 = vld [vmem:[%s3 + $0x10] sm:$0xff]
    %v69 = vld [vmem:[%s3 + $0x18] sm:$0xff]
    %v70 = vld [vmem:[%s3 + $0x20] sm:$0xff]
    %v71 = vld [vmem:[%s3 + $0x28] sm:$0xff]
    %v72 = vld [vmem:[%s3 + $0x30] sm:$0xff]
    %v73 = vld [vmem:[%s3 + $0x38] sm:$0xff]
    %v74 = vld [vmem:[%s3 + $0x40] sm:$0xff]
    %v75 = vld [vmem:[%s3 + $0x48] sm:$0xff]
    %v76 = vld [vmem:[%s3 + $0x50] sm:$0xff]
    %v77 = vld [vmem:[%s3 + $0x58] sm:$0xff]
    %v78 = vld [vmem:[%s3 + $0x60] sm:$0xff]
    %v79 = vld [vmem:[%s3 + $0x68] sm:$0xff]
    %v80 = vld [vmem:[%s3 + $0x70] sm:$0xff]
    %v81 = vld [vmem:[%s3 + $0x78] sm:$0xff]
    %s82 = sld [smem:[#allocation2]]
    %v83 = vstv %s82
    %84 = vmatpush.msra.mxu0 %v81
    %85 = vmatpush.msra.mxu0 %v80
    %86 = vmatpush.msra.mxu0 %v79
    %87 = vmatpush.msra.mxu0 %v78
    %88 = vmatpush.msra.mxu0 %v77
    %89 = vmatpush.msra.mxu0 %v76
    %90 = vmatpush.msra.mxu0 %v75
    %91 = vmatpush.msra.mxu0 %v74
    %92 = vmatpush.msra.mxu0 %v73
    %93 = vmatpush.msra.mxu0 %v72
    %94 = vmatpush.msra.mxu0 %v71
    %95 = vmatpush.msra.mxu0 %v70
    %96 = vmatpush.msra.mxu0 %v69
    %97 = vmatpush.msra.mxu0 %v68
    %98 = vmatpush.msra.mxu0 %v67
    %99 = vmatpush.msra.mxu0 %v66
    %100 = vmatmul.f32.gmra.mxu0 %v65
    %v101 = vpop.f32.mrf.mxu0
    %v102 = vadd.f32 %v83, %v101
    %103 = vdwg.mxu0
    %v104 = vmax.f32 %v102, -10.0
    %v105 = vmin.f32 %v104, 10.0
    %vm106 = vcmask 25600
    %107 = vst.msk [vmem:[#allocation3] sm:$0x3] %vm106, %v105
    // Predicated region
    $region22: #{tpu_custom_call.1} parent=1 // pred_check
      _
    $region23: #{tpu_custom_call.1} parent=1 // pred_check_branch
      %109 = sbr.rel (0) target = $region25
    $region24: #{tpu_custom_call.1} parent=1 // pred_region
      %111 = vsyncadd [#allocation4], 0
      %s113 = sshll.u32 [#allocation3], 4
      %s114 = int_to_ptr.vmem [resolvable:$true] %s113
      %s115 = sshll.u32 %s5, 4
      %s116 = int_to_ptr.hbm [resolvable:$true] %s115
      %118 = dma.vmem_to_hbm [thread:$0]  %s114, 32, %s116, [#allocation4]
    $region25: #{tpu_custom_call.1} parent=1 // pred_fallthru
      _
    // Predicated region
    $region26: #{tpu_custom_call.1} parent=1 // pred_check
      _
    $region27: #{tpu_custom_call.1} parent=1 // pred_check_branch
      %120 = sbr.rel (0) target = $region29
    $region28: #{tpu_custom_call.1} parent=1 // pred_region
      %122 = dma.done [#allocation4], 32
    $region29: #{tpu_custom_call.1} parent=1 // pred_fallthru
      _
    %123 = vsyncpa [#allocation4], 1

</llo_original>
